<compile_context>
chip_gen: v6e
topology: v6e:2x2x1
jax: 0.10.0
libtpu: 0.0.40
codegen_flags: <defaults>
</compile_context>

<pallas_src>
import functools

import jax
import jax.numpy as jnp
from jax.experimental import pallas as pl
from jax.experimental.pallas import tpu as pltpu

_MIB = 1024 * 1024
# Minimum contiguous bytes per cropped row for the strided-DMA crop to be
# DMA-efficient; below this a dense full-plane DMA + in-VMEM slice wins.
_MIN_DMA_RUN_BYTES = 256


def _vmem_budgets():
    """(resident_vmem_budget, vmem_limit) in bytes, per TPU generation."""
    try:
        physical = pltpu.get_tpu_info().vmem_capacity_bytes
    except Exception:  # non-TPU backend / older jax: assume the smallest (v7x)
        physical = 64 * _MIB
    # Total resident VMEM = 2 pipeline buffers x (input block + output block).
    # ~1/4 of physical, capped at 24 MiB: large blocks on v5e/v6e (128 MiB
    # physical) while staying safely below the 64 MiB-per-TC cliff on v7x.
    resident_budget = min(physical // 4, 24 * _MIB)
    vmem_limit = max(min(physical // 2, 32 * _MIB), resident_budget + 4 * _MIB)
    return int(resident_budget), int(vmem_limit)


def _pick_plane_tile(num_planes, per_plane_resident_bytes, resident_budget):
    """Plane-tile size set by the VMEM budget, not by B*C's factorization."""
    max_tp = max(1, resident_budget // max(1, 2 * per_plane_resident_bytes))
    tp = int(min(num_planes, max_tp))
    # v7x has 2 TensorCores: make sure the (parallel) grid axis has >= 2 steps
    # whenever there is more than one plane so both cores get work.
    if tp >= num_planes and num_planes >= 2:
        tp = int(pl.cdiv(num_planes, 2))
    return tp


def _crop_vmem_kernel(x_ref, o_ref, *, h_start, w_start, h_len, w_len):
    # x_ref: (tp, H, W) VMEM block; o_ref: (tp, h_len, w_len) VMEM block.
    # Static slice of the block -> copy of the cropped window.
    o_ref[...] = x_ref[:, h_start:h_start + h_len, w_start:w_start + w_len]


def _crop_dma_kernel(x_hbm, o_ref, sem, *, tile_planes, num_planes,
                     h_start, w_start, h_len, w_len):
    # x_hbm: full (P, H, W) input left in HBM; o_ref: (tp, h_len, w_len)
    # pipelined VMEM output block.  The crop is performed by the DMA itself:
    # a strided HBM read of exactly the cropped window lands dense in the
    # output block, so the body needs zero VPU/XLU work and no (masked)
    # vector stores; the pipeline's output writeback overlaps the next fetch.
    i = pl.program_id(0)
    p0 = i * tile_planes
    rem = num_planes % tile_planes  # static size of the ragged last tile

    def copy(n_planes):
        cp = pltpu.make_async_copy(
            x_hbm.at[pl.ds(p0, n_planes),
                     pl.ds(h_start, h_len),
                     pl.ds(w_start, w_len)],
            o_ref.at[pl.ds(0, n_planes)],
            sem)
        cp.start()
        cp.wait()

    if rem == 0:
        copy(tile_planes)
    else:
        last = pl.num_programs(0) - 1

        @pl.when(i != last)
        def _():
            copy(tile_planes)

        @pl.when(i == last)
        def _():
            copy(rem)


def _compiler_params(vmem_limit):
    return pltpu.CompilerParams(
        dimension_semantics=("parallel",),
        vmem_limit_bytes=int(vmem_limit))


def _crop_planes_dma(x_planes, h_start, w_start, h_len, w_len,
                     resident_budget, vmem_limit):
    planes, H, W = x_planes.shape
    itemsize = jnp.dtype(x_planes.dtype).itemsize
    out_plane_bytes = h_len * w_len * itemsize
    tp = _pick_plane_tile(planes, out_plane_bytes, resident_budget)
    kernel = functools.partial(
        _crop_dma_kernel, tile_planes=tp, num_planes=planes,
        h_start=h_start, w_start=w_start, h_len=h_len, w_len=w_len)
    return pl.pallas_call(
        kernel,
        out_shape=jax.ShapeDtypeStruct((planes, h_len, w_len), x_planes.dtype),
        grid=(pl.cdiv(planes, tp),),
        in_specs=[pl.BlockSpec(memory_space=pl.ANY)],
        out_specs=pl.BlockSpec((tp, h_len, w_len), lambda i: (i, 0, 0)),
        scratch_shapes=[pltpu.SemaphoreType.DMA],
        compiler_params=_compiler_params(vmem_limit),
        cost_estimate=pl.CostEstimate(
            flops=0, transcendentals=0,
            bytes_accessed=int(2 * planes * out_plane_bytes)),
    )(x_planes)


def _crop_planes_vmem(x_planes, h_start, w_start, h_len, w_len,
                      resident_budget, vmem_limit):
    planes, H, W = x_planes.shape
    itemsize = jnp.dtype(x_planes.dtype).itemsize
    per_plane_bytes = (H * W + h_len * w_len) * itemsize
    tp = _pick_plane_tile(planes, per_plane_bytes, resident_budget)
    kernel = functools.partial(
        _crop_vmem_kernel,
        h_start=h_start, w_start=w_start, h_len=h_len, w_len=w_len)
    return pl.pallas_call(
        kernel,
        out_shape=jax.ShapeDtypeStruct((planes, h_len, w_len), x_planes.dtype),
        grid=(pl.cdiv(planes, tp),),
        # Last two block dims equal the full array extents -> (8,128) rule ok
        # for arbitrary H/W; the leading plane-tile dim may be ragged.
        in_specs=[pl.BlockSpec((tp, H, W), lambda i: (i, 0, 0))],
        out_specs=pl.BlockSpec((tp, h_len, w_len), lambda i: (i, 0, 0)),
        compiler_params=_compiler_params(vmem_limit),
        cost_estimate=pl.CostEstimate(
            flops=0, transcendentals=0,
            bytes_accessed=int(planes * per_plane_bytes)),
    )(x_planes)


def crop_layer(x, crop_set):
    """Pallas implementation of CropLayer.forward.

    x: (B, C, H, W); crop_set = (-rows_to_crop, -cols_to_crop).
    Returns x[:, :, r:-r, c:-c] with exact PyTorch/Python slice semantics
    (including the degenerate r==0 / c==0 case, where `0:-0` is empty).
    """
    rows_to_crop = -crop_set[0]
    cols_to_crop = -crop_set[1]
    assert rows_to_crop >= 0
    assert cols_to_crop >= 0

    B, C, H, W = x.shape
    # Exact Python slice semantics of [r:-r] / [c:-c] (note -0 == 0).
    h_start, h_stop, _ = slice(rows_to_crop, -rows_to_crop).indices(H)
    w_start, w_stop, _ = slice(cols_to_crop, -cols_to_crop).indices(W)
    h_len = max(0, h_stop - h_start)
    w_len = max(0, w_stop - w_start)

    if B == 0 or C == 0 or h_len == 0 or w_len == 0:
        # Degenerate (empty) slice -> no kernel launch needed.
        return jnp.zeros((B, C, h_len, w_len), dtype=x.dtype)

    itemsize = jnp.dtype(x.dtype).itemsize
    planes = B * C
    x_planes = x.reshape(planes, H, W)   # free: (B, C) fuse on contiguous NCHW
    resident_budget, vmem_limit = _vmem_budgets()
    args = (x_planes, h_start, w_start, h_len, w_len,
            resident_budget, vmem_limit)

    if w_len * itemsize >= _MIN_DMA_RUN_BYTES:
        try:
            out = _crop_planes_dma(*args)
            out = jax.block_until_ready(out)   # no-op on tracers under jit
        except Exception:
            # TODO(synk): drop this fallback once minor-dim windowed HBM DMAs
            # are guaranteed by the deployed Mosaic version.
            out = _crop_planes_vmem(*args)
    else:
        out = _crop_planes_vmem(*args)

    return out.reshape(B, C, h_len, w_len)


def _reference(x, crop_set):
    r = -crop_set[0]
    c = -crop_set[1]
    return x[:, :, slice(r, -r), slice(c, -c)]


if __name__ == "__main__":
    key = jax.random.PRNGKey(0)

    # Small NCHW input (ACNet-style 1-pixel border crops of feature maps):
    # exercises the narrow-row VMEM-slice path.
    x = jax.random.normal(key, (2, 4, 16, 16), dtype=jnp.float32)

    out = jax.block_until_ready(crop_layer(x, (-1, -1)))
    ref = _reference(x, (-1, -1))
    assert out.shape == (2, 4, 14, 14), out.shape
    assert jnp.array_equal(out, ref), "crop (-1,-1) mismatch"

    out2 = jax.block_until_ready(crop_layer(x, (-2, -3)))
    ref2 = _reference(x, (-2, -3))
    assert out2.shape == (2, 4, 12, 10), out2.shape
    assert jnp.array_equal(out2, ref2), "crop (-2,-3) mismatch"

    # Ragged plane tiling (B*C = 7 does not divide the chosen plane tile).
    x3 = jax.random.normal(jax.random.PRNGKey(0), (1, 7, 16, 16),
                           dtype=jnp.float32)
    out3 = jax.block_until_ready(crop_layer(x3, (-1, -1)))
    assert out3.shape == (1, 7, 14, 14), out3.shape
    assert jnp.array_equal(out3, _reference(x3, (-1, -1))), "ragged mismatch"

    # Wider rows: exercises the strided-DMA window-crop path (>=256 B runs)
    # including its ragged last plane tile (B*C = 5, tile = 3).
    x4 = jax.random.normal(jax.random.PRNGKey(0), (1, 5, 8, 144),
                           dtype=jnp.float32)
    out4 = jax.block_until_ready(crop_layer(x4, (-1, -2)))
    assert out4.shape == (1, 5, 6, 140), out4.shape
    assert jnp.array_equal(out4, _reference(x4, (-1, -2))), "DMA-crop mismatch"

    print("KERNEL_OK")
</pallas_src>

<mosaic_0001>
module attributes {stable_mosaic.version = 11 : i64} {
  func.func @_crop_vmem_kernel(%arg0: i32, %arg1: memref<4x16x16xf32, #tpu.memory_space<vmem>>, %arg2: memref<4x14x14xf32, #tpu.memory_space<vmem>>) attributes {dimension_semantics = [#tpu.dimension_semantics<parallel>], iteration_bounds = array<i64: 2>, scalar_prefetch = 0 : i64, scratch_operands = 0 : i64, tpu.core_type = #tpu.core_type<tc>, window_params = [{transform_indices = @transform_0, window_bounds = array<i64: 4, 16, 16>}, {transform_indices = @transform_1, window_bounds = array<i64: 4, 14, 14>}]} {
    %c0 = arith.constant 0 : index
    %c1 = arith.constant 1 : index
    %c1_0 = arith.constant 1 : index
    %0 = vector.load %arg1[%c0, %c1, %c1_0] : memref<4x16x16xf32, #tpu.memory_space<vmem>>, vector<4x14x14xf32>
    %c0_1 = arith.constant 0 : index
    %c0_2 = arith.constant 0 : index
    %c0_3 = arith.constant 0 : index
    %1 = vector.load %arg2[%c0_1, %c0_2, %c0_3] : memref<4x14x14xf32, #tpu.memory_space<vmem>>, vector<4x14x14xf32>
    tpu.vector_store %arg2[%c0_1, %c0_2, %c0_3], %0 {strides = array<i32>} : memref<4x14x14xf32, #tpu.memory_space<vmem>>, vector<4x14x14xf32>,
    return
  }
  func.func @transform_0(%arg0: i32) -> (i32, i32, i32) {
    %c0_i32 = arith.constant 0 : i32
    %c0_i32_0 = arith.constant 0 : i32
    %c0_i32_1 = arith.constant 0 : i32
    return %arg0, %c0_i32, %c0_i32_0 : i32, i32, i32
  }
  func.func @transform_1(%arg0: i32) -> (i32, i32, i32) {
    %c0_i32 = arith.constant 0 : i32
    %c0_i32_0 = arith.constant 0 : i32
    %c0_i32_1 = arith.constant 0 : i32
    return %arg0, %c0_i32, %c0_i32_0 : i32, i32, i32
  }
}

</mosaic_0001>

<llo_original>
// kernel: tpu_custom_call.1
$region0: #{tpu_custom_call.1}
  #allocation0 [shape = 'u32[]', space=smem, size = 0x4, offset = 0x4, fixed_abs, tag = 'smem constant byte address 0x4 - core index']
  #allocation1 [shape = 'u32[144,128]{1,0:T(1,128)}', space=vmem, size = 0x12000, scoped, tag = 'internal scratch']
  %s0 = inlined_call_operand.hbm [shape: f32[8,16,16], index: 0, kind: input, shape index: {}]
  %s1 = inlined_call_operand.vmem [shape: f32[8,14,14], index: 1, kind: output, shape index: {}]
  %s2 = sld [smem:[#allocation0]]
  $region41: #{tpu_custom_call.1} parent=0
    _
  %s4 = ssub.s32 1, %s2
  %s5 = scalar_select 0, %s4, %s2
  $region1: #{tpu_custom_call.1} parent=0
    #allocation2 [shape = 'u8[65536]{0}', space=vmem, size = 0x10000, scoped, tag = 'input window, operand 0']
    #allocation3 [shape = 's32[2]{0}', space=sflag, size = 0x8, scoped, tag = 'scoped memory for tpu_custom_call.1']
    %6 = vsyncpa [#allocation3], 0
    %s7 = scalar_lea.sflag [#allocation3], 1
    %8 = vsyncpa %s7, 0
    loop: start=0, step=1, limit=4
    $region2: #{tpu_custom_call.1} parent=1 // loop_pre_header
      _
    $region3: #{tpu_custom_call.1} parent=1 // loop_header
      %s10 = sphi 0, %s14
      %p11 = scmp.ge.s32.totalorder %s10, 4
      %s20 = sphi 0, %s22
      %s23 = sphi 0, %s20
      %s24 = sphi 0, %s23
      %s40 = sphi 0, %s24
      %s46 = sphi 0, %s48
      %s49 = sphi 0, %s46
      %s50 = sphi 0, %s49
      %s66 = sphi 0, %s50
    $region4: #{tpu_custom_call.1} parent=1 // loop_header_branch
      %13 = sbr.rel (%p11) target = $region8
    $region5: #{tpu_custom_call.1} parent=1 // loop_body
      %s15 = ssub.s32 %s10, 1
      %s16 = ssub.s32 %s10, 2
      %s17 = sadd.s32 %s10, 1
      %s18 = ssub.s32 %s10, %s17
      %p19 = scmp.eq.s32.totalorder %s18, 0
      %s21 = sadd.s32 %s20, 1
      %s22 = scalar_select %p19, %s20, %s21
      %p25 = pneg %p19
      %p26 = scmp.eq.s32.totalorder %s10, 1
      %p27 = por %p25, %p26
      %p28 = scmp.ne.s32.totalorder %s20, %s23
      %p29 = scmp.eq.s32.totalorder %s10, 0
      %p30 = por %p28, %p29
      %p31 = scmp.ne.s32.totalorder %s20, %s23
      %p32 = scmp.eq.s32.totalorder %s15, 1
      %p33 = por %p31, %p32
      %p34 = scmp.ne.s32.totalorder %s23, %s24
      %p35 = scmp.eq.s32.totalorder %s15, 0
      %p36 = por %p34, %p35
      %p37 = scmp.ne.s32.totalorder %s23, %s24
      %p38 = scmp.eq.s32.totalorder %s16, 1
      %p39 = por %p37, %p38
      %p41 = scmp.ne.s32.totalorder %s24, %s40
      %p42 = scmp.eq.s32.totalorder %s16, 0
      %p43 = por %p41, %p42
      %s44 = ssub.s32 %s10, %s17
      %p45 = scmp.eq.s32.totalorder %s44, 0
      %s47 = sadd.s32 %s46, 1
      %s48 = scalar_select %p45, %s46, %s47
      %p51 = pneg %p45
      %p52 = scmp.eq.s32.totalorder %s10, 1
      %p53 = por %p51, %p52
      %p54 = scmp.ne.s32.totalorder %s46, %s49
      %p55 = scmp.eq.s32.totalorder %s10, 0
      %p56 = por %p54, %p55
      %p57 = scmp.ne.s32.totalorder %s46, %s49
      %p58 = scmp.eq.s32.totalorder %s15, 1
      %p59 = por %p57, %p58
      %p60 = scmp.ne.s32.totalorder %s49, %s50
      %p61 = scmp.eq.s32.totalorder %s15, 0
      %p62 = por %p60, %p61
      %p63 = scmp.ne.s32.totalorder %s49, %s50
      %p64 = scmp.eq.s32.totalorder %s16, 1
      %p65 = por %p63, %p64
      %p67 = scmp.ne.s32.totalorder %s50, %s66
      %p68 = scmp.eq.s32.totalorder %s16, 0
      %p69 = por %p67, %p68
      %p70 = scmp.le.s32.totalorder 1, %s10
      %p71 = scmp.lt.s32.totalorder %s10, 3
      %p72 = pnand %p70, %p71
      %p73 = pneg %p72
      // Predicated region
      $region9: #{tpu_custom_call.1} parent=5 // pred_check
        _
      $region10: #{tpu_custom_call.1} parent=5 // pred_check_branch
        %75 = sbr.rel (%p72) target = $region12
      $region11: #{tpu_custom_call.1} parent=5 // pred_region
        %s76 = ssub.s32 %s10, 1
      $region12: #{tpu_custom_call.1} parent=5 // pred_fallthru
        _
      %p77 = scmp.lt.s32.totalorder %s10, 2
      // Predicated region
      $region13: #{tpu_custom_call.1} parent=5 // pred_check
        %p78 = pneg %p77
      $region14: #{tpu_custom_call.1} parent=5 // pred_check_branch
        %80 = sbr.rel (%p78) target = $region16
      $region15: #{tpu_custom_call.1} parent=5 // pred_region
        // Predicated region
        $region17: #{tpu_custom_call.1} parent=15 // pred_check
          %p81 = pneg %p30
        $region18: #{tpu_custom_call.1} parent=15 // pred_check_branch
          %83 = sbr.rel (%p81) target = $region20
        $region19: #{tpu_custom_call.1} parent=15 // pred_region
          %s84 = sand.u32 %s20, 1
          %s85 = scalar_lea.sflag [#allocation3], %s84
          %s86 = sand.u32 %s20, 1
          %s87 = smul.addr %s86, 64
          %s88 = scalar_lea.vmem [#allocation2], %s87
          %s89 = smul.u32 4, %s10
          %s91 = ssub.s32 1024, 1024
          %92 = vsyncadd %s85, %s91
          %s93 = smul.addr %s89, 2
          %s94 = smul.addr %s93, 128
          %s95 = scalar_lea.hbm %s0, %s94
          %s96 = sshll.u32 %s88, 4
          %s97 = int_to_ptr.vmem [resolvable:$true] %s96
          %102 = dma.hbm_to_vmem [thread:$0]  %s95, 1024, %s97, %s85, 128, 128, 8
        $region20: #{tpu_custom_call.1} parent=15 // pred_fallthru
          _
      $region16: #{tpu_custom_call.1} parent=5 // pred_fallthru
        _
      %p103 = scmp.le.s32.totalorder 1, %s10
      %p104 = scmp.lt.s32.totalorder %s10, 3
      %p105 = pnand %p103, %p104
      %p106 = pneg %p105
      // Predicated region
      $region21: #{tpu_custom_call.1} parent=5 // pred_check
        _
      $region22: #{tpu_custom_call.1} parent=5 // pred_check_branch
        %108 = sbr.rel (%p105) target = $region24
      $region23: #{tpu_custom_call.1} parent=5 // pred_region
        %s109 = ssub.s32 %s10, 1
        %s110 = sand.u32 %s23, 1
        %s111 = scalar_lea.sflag [#allocation3], %s110
        %s112 = sand.u32 %s23, 1
        %s113 = smul.addr %s112, 64
        %s114 = scalar_lea.vmem [#allocation2], %s113
        // Predicated region
        $region25: #{tpu_custom_call.1} parent=23 // pred_check
          %p115 = pneg %p36
        $region26: #{tpu_custom_call.1} parent=23 // pred_check_branch
          %117 = sbr.rel (%p115) target = $region28
        $region27: #{tpu_custom_call.1} parent=23 // pred_region
          %118 = dma.done %s111, 1024
        $region28: #{tpu_custom_call.1} parent=23 // pred_fallthru
          _
        %s119 = sand.u32 %s23, 1
        %s120 = scalar_lea.sflag [#allocation3], %s119
        %s121 = sand.u32 %s23, 1
        %s122 = smul.addr %s121, 64
        %s123 = scalar_lea.vmem [#allocation2], %s122
        %p124 = pneg %p36
        %p125 = pneg %p33
        %p126 = pneg %p62
        %p127 = pneg %p59
        %s128 = smul.u32 4, %s15
        %p129 = scmp.lt.s32.totalorder %s128, 7
        %s130 = scalar_select %p129, %s128, 7
        %s131 = smul.addr %s130, 2
        %s132 = smul.addr %s131, 8
        %s133 = scalar_lea.vmem %s1, %s132
        %s134 = smul.u32 4, %s15
        %s135 = smul.u32 4, %s15
        %p136 = scmp.lt.s32.totalorder %s135, 7
        %s137 = scalar_select %p136, %s135, 7
        %s138 = smul.addr %s137, 2
        %s139 = smul.addr %s138, 8
        %s140 = scalar_lea.vmem %s1, %s139
        %s141 = smul.u32 4, %s15
        %v142 = vld [vmem:[%s114 + $0x1] sm:$0xff]
        %v143 = vld [vmem:[%s114 + $0x9] sm:$0x3f]
        %v144 = vld [vmem:[%s114 + $0x11] sm:$0xff]
        %v145 = vld [vmem:[%s114 + $0x19] sm:$0x3f]
        %v146 = vld [vmem:[%s114 + $0x21] sm:$0xff]
        %v147 = vld [vmem:[%s114 + $0x29] sm:$0x3f]
        %v148 = vld [vmem:[%s114 + $0x31] sm:$0xff]
        %v149 = vld [vmem:[%s114 + $0x39] sm:$0x3f]
        %158 = vrot.lane.b32.xlu0 %v142, 127
        %v159 = vpop.permute.xlu0 %158
        %160 = vrot.lane.b32.xlu0 %v143, 127
        %v161 = vpop.permute.xlu0 %160
        %162 = vrot.lane.b32.xlu0 %v144, 127
        %v163 = vpop.permute.xlu0 %162
        %164 = vrot.lane.b32.xlu0 %v145, 127
        %v165 = vpop.permute.xlu0 %164
        %166 = vrot.lane.b32.xlu0 %v146, 127
        %v167 = vpop.permute.xlu0 %166
        %168 = vrot.lane.b32.xlu0 %v147, 127
        %v169 = vpop.permute.xlu0 %168
        %170 = vrot.lane.b32.xlu0 %v148, 127
        %v171 = vpop.permute.xlu0 %170
        %172 = vrot.lane.b32.xlu0 %v149, 127
        %v173 = vpop.permute.xlu0 %172
        %vm182 = vcmask 113664
        %183 = vst.msk [vmem:[%s140] sm:$0xff] %vm182, %v159
        %vm184 = vcmask 111616
        %185 = vst.msk [vmem:[%s140 + $0x8] sm:$0x3f] %vm184, %v161
        %186 = vst.msk [vmem:[%s140 + $0x10] sm:$0xff] %vm182, %v163
        %187 = vst.msk [vmem:[%s140 + $0x18] sm:$0x3f] %vm184, %v165
        %188 = vst.msk [vmem:[%s140 + $0x20] sm:$0xff] %vm182, %v167
        %189 = vst.msk [vmem:[%s140 + $0x28] sm:$0x3f] %vm184, %v169
        %190 = vst.msk [vmem:[%s140 + $0x30] sm:$0xff] %vm182, %v171
        %191 = vst.msk [vmem:[%s140 + $0x38] sm:$0x3f] %vm184, %v173
        %s192 = smul.u32 4, %s15
        %p193 = scmp.lt.s32.totalorder %s192, 7
        %s194 = scalar_select %p193, %s192, 7
        %s195 = smul.addr %s194, 2
        %s196 = smul.addr %s195, 8
        %s197 = scalar_lea.vmem %s1, %s196
        // Predicated region
        $region29: #{tpu_custom_call.1} parent=23 // pred_check
          %p198 = pneg %p59
        $region30: #{tpu_custom_call.1} parent=23 // pred_check_branch
          %200 = sbr.rel (%p198) target = $region32
        $region31: #{tpu_custom_call.1} parent=23 // pred_region
          %s201 = smul.u32 4, %s15
        $region32: #{tpu_custom_call.1} parent=23 // pred_fallthru
          _
      $region24: #{tpu_custom_call.1} parent=5 // pred_fallthru
        _
      %p202 = scmp.le.s32.totalorder 2, %s10
      // Predicated region
      $region33: #{tpu_custom_call.1} parent=5 // pred_check
        %p203 = pneg %p202
      $region34: #{tpu_custom_call.1} parent=5 // pred_check_branch
        %205 = sbr.rel (%p203) target = $region36
      $region35: #{tpu_custom_call.1} parent=5 // pred_region
        %s206 = ssub.s32 %s10, 2
        // Predicated region
        $region37: #{tpu_custom_call.1} parent=35 // pred_check
          %p207 = pneg %p65
        $region38: #{tpu_custom_call.1} parent=35 // pred_check_branch
          %209 = sbr.rel (%p207) target = $region40
        $region39: #{tpu_custom_call.1} parent=35 // pred_region
          %s210 = smul.u32 4, %s16
          %p211 = scmp.lt.s32.totalorder %s210, 7
          %s212 = scalar_select %p211, %s210, 7
          %s213 = smul.addr %s212, 2
          %s214 = smul.addr %s213, 8
          %s215 = scalar_lea.vmem %s1, %s214
        $region40: #{tpu_custom_call.1} parent=35 // pred_fallthru
          _
      $region36: #{tpu_custom_call.1} parent=5 // pred_fallthru
        _
    $region6: #{tpu_custom_call.1} parent=1 // loop_footer
      %s14 = sadd.s32 1, %s10
    $region7: #{tpu_custom_call.1} parent=1 // loop_footer_branch
      %9 = sbr.rel target = $region3
    $region8: #{tpu_custom_call.1} parent=1 // loop_exit
      _
    %216 = vsyncpa [#allocation3], 1
    %s217 = scalar_lea.sflag [#allocation3], 1
    %218 = vsyncpa %s217, 1

</llo_original>
